<compile_context>
chip_gen: v6e
topology: v6e:2x2x1
jax: 0.10.0
libtpu: 0.0.40
codegen_flags: <defaults>
</compile_context>

<pallas_src>
import jax
import jax.numpy as jnp
import numpy as np
from jax.experimental import pallas as pl
from jax.experimental.pallas import tpu as pltpu

IN_DIM = 111
OUT_DIM = 18
MASK_INDICES = np.array(
    [0, 1, 2, 3, 4, 5, 49, 50, 51, 61, 62, 63, 80, 81, 82, 92, 93, 94],
    dtype=np.int32,
)
# Contiguous runs covered by MASK_INDICES (start, stop), verified below.
_RUNS = ((0, 6), (49, 52), (61, 64), (80, 83), (92, 95))
assert np.array_equal(
    np.concatenate([np.arange(a, b) for a, b in _RUNS]), MASK_INDICES
)

# Max batch-tile rows: 2048 * 128 lanes * 4 B = 1 MiB per f32 buffer; with
# double-buffered x and out tiles this stays far under every chip's default
# scoped-VMEM limit while still saturating HBM bandwidth.
_TB_MAX = 2048
_TARGET_STEPS = 8  # >=4 steps for pipelining; 8 balances v7x's 2 TensorCores.


def _skill_mask_kernel(x_ref, o_ref):
    # x_ref: (TB, 111) VMEM tile; o_ref: (TB, 18).
    # Exact gather via static lane slices + minor-dim concat (XLU work only).
    x = x_ref[...]
    o_ref[...] = jnp.concatenate(
        [x[:, a:b] for a, b in _RUNS], axis=-1
    )


def _choose_tb(B: int) -> int:
    """Pick a batch tile: multiple of 8, <= _TB_MAX, aiming for ~8 grid steps."""
    if B < 8:
        # Full-extent single block (always legal); launch overhead dominates.
        return B
    tb = -(-B // _TARGET_STEPS)          # cdiv(B, target steps)
    tb = ((tb + 7) // 8) * 8             # round up to a multiple of 8
    return max(8, min(tb, _TB_MAX))


def skill_mask(x: jax.Array) -> jax.Array:
    """x: (B, 111) -> (B, 18), equal to x[:, MASK_INDICES]."""
    B, in_dim = x.shape
    assert in_dim == IN_DIM

    tb = _choose_tb(B)
    grid = (pl.cdiv(B, tb),)

    itemsize = jnp.dtype(x.dtype).itemsize
    cost = pl.CostEstimate(
        flops=0,
        transcendentals=0,
        bytes_accessed=B * (IN_DIM + OUT_DIM) * itemsize,
    )

    return pl.pallas_call(
        _skill_mask_kernel,
        out_shape=jax.ShapeDtypeStruct((B, OUT_DIM), x.dtype),
        grid_spec=pltpu.PrefetchScalarGridSpec(
            num_scalar_prefetch=0,
            grid=grid,
            in_specs=[
                # Batch-tiled input stream: (tb, 111); last dim is full-extent.
                pl.BlockSpec((tb, IN_DIM), lambda i: (i, 0)),
            ],
            out_specs=pl.BlockSpec((tb, OUT_DIM), lambda i: (i, 0)),
        ),
        compiler_params=pltpu.CompilerParams(
            # Batch tiles are independent -> megacore can split the grid.
            dimension_semantics=("parallel",)
        ),
        cost_estimate=cost,
    )(x)


if __name__ == "__main__":
    key = jax.random.PRNGKey(0)

    # Primary check: small batch (single full-size block, grid=(1,)).
    B = 8
    x = jax.random.normal(key, (B, IN_DIM), dtype=jnp.float32)
    out = jax.block_until_ready(skill_mask(x))
    ref = x[:, MASK_INDICES]
    assert out.shape == (B, OUT_DIM), out.shape
    np.testing.assert_allclose(np.asarray(out), np.asarray(ref), rtol=0, atol=0)

    # Batch not a multiple of 8: 8-row tile, 2 grid steps, clipped last block.
    B2 = 13
    x2 = jax.random.normal(jax.random.PRNGKey(1), (B2, IN_DIM), dtype=jnp.float32)
    out2 = jax.block_until_ready(skill_mask(x2))
    np.testing.assert_allclose(
        np.asarray(out2), np.asarray(x2[:, MASK_INDICES]), rtol=0, atol=0
    )

    # Multi-step pipelined path with a partial trailing block (tb=16, grid=7).
    B3 = 100
    x3 = jax.random.normal(jax.random.PRNGKey(2), (B3, IN_DIM), dtype=jnp.float32)
    out3 = jax.block_until_ready(skill_mask(x3))
    np.testing.assert_allclose(
        np.asarray(out3), np.asarray(x3[:, MASK_INDICES]), rtol=0, atol=0
    )

    print("KERNEL_OK")
</pallas_src>

<mosaic_0001>
module attributes {stable_mosaic.version = 11 : i64} {
  func.func @_skill_mask_kernel(%arg0: i32, %arg1: memref<8x111xf32, #tpu.memory_space<vmem>>, %arg2: memref<8x18xf32, #tpu.memory_space<vmem>>) attributes {dimension_semantics = [#tpu.dimension_semantics<parallel>], iteration_bounds = array<i64: 1>, scalar_prefetch = 0 : i64, scratch_operands = 0 : i64, tpu.core_type = #tpu.core_type<tc>, window_params = [{transform_indices = @transform_0, window_bounds = array<i64: 8, 111>}, {transform_indices = @transform_1, window_bounds = array<i64: 8, 18>}]} {
    %c0 = arith.constant 0 : index
    %c0_0 = arith.constant 0 : index
    %0 = vector.load %arg1[%c0, %c0_0] : memref<8x111xf32, #tpu.memory_space<vmem>>, vector<8x111xf32>
    %1 = vector.extract_strided_slice %0 {offsets = [0, 0], sizes = [8, 6], strides = [1, 1]} : vector<8x111xf32> to vector<8x6xf32>
    %2 = vector.extract_strided_slice %0 {offsets = [0, 49], sizes = [8, 3], strides = [1, 1]} : vector<8x111xf32> to vector<8x3xf32>
    %3 = vector.extract_strided_slice %0 {offsets = [0, 61], sizes = [8, 3], strides = [1, 1]} : vector<8x111xf32> to vector<8x3xf32>
    %4 = vector.extract_strided_slice %0 {offsets = [0, 80], sizes = [8, 3], strides = [1, 1]} : vector<8x111xf32> to vector<8x3xf32>
    %5 = vector.extract_strided_slice %0 {offsets = [0, 92], sizes = [8, 3], strides = [1, 1]} : vector<8x111xf32> to vector<8x3xf32>
    %6 = tpu.concatenate %1, %2, %3, %4, %5 in 1 : vector<8x6xf32>, vector<8x3xf32>, vector<8x3xf32>, vector<8x3xf32>, vector<8x3xf32> -> vector<8x18xf32>
    %c0_1 = arith.constant 0 : index
    %c0_2 = arith.constant 0 : index
    %7 = vector.load %arg2[%c0_1, %c0_2] : memref<8x18xf32, #tpu.memory_space<vmem>>, vector<8x18xf32>
    tpu.vector_store %arg2[%c0_1, %c0_2], %6 {strides = array<i32>} : memref<8x18xf32, #tpu.memory_space<vmem>>, vector<8x18xf32>,
    return
  }
  func.func @transform_0(%arg0: i32) -> (i32, i32) {
    %c0_i32 = arith.constant 0 : i32
    %c0_i32_0 = arith.constant 0 : i32
    return %arg0, %c0_i32 : i32, i32
  }
  func.func @transform_1(%arg0: i32) -> (i32, i32) {
    %c0_i32 = arith.constant 0 : i32
    %c0_i32_0 = arith.constant 0 : i32
    return %arg0, %c0_i32 : i32, i32
  }
}

</mosaic_0001>

<llo_original>
// kernel: tpu_custom_call.1
$region0: #{tpu_custom_call.1}
  #allocation0 [shape = 'u32[]', space=smem, size = 0x4, offset = 0x4, fixed_abs, tag = 'smem constant byte address 0x4 - core index']
  #allocation1 [shape = 'u32[144,128]{1,0:T(1,128)}', space=vmem, size = 0x12000, scoped, tag = 'internal scratch']
  %s0 = inlined_call_operand.hbm [shape: f32[8,111], index: 0, kind: input, shape index: {}]
  %s1 = inlined_call_operand.hbm [shape: f32[8,18], index: 1, kind: output, shape index: {}]
  %s2 = sld [smem:[#allocation0]]
  $region18: #{tpu_custom_call.1} parent=0
    _
  %s4 = ssub.s32 1, %s2
  %s5 = scalar_select 0, %s4, %s2
  $region1: #{tpu_custom_call.1} parent=0
    #allocation2 [shape = 'u8[4096]{0}', space=vmem, size = 0x1000, scoped, tag = 'input window, operand 0, single buffered']
    #allocation3 [shape = 's32[1]{0}', space=sflag, size = 0x4, scoped, tag = 'scoped memory for tpu_custom_call.1']
    #allocation4 [shape = 's32[1]{0}', space=sflag, size = 0x4, scoped, tag = 'scoped memory for tpu_custom_call.1']
    #allocation5 [shape = 'u8[4096]{0}', space=vmem, size = 0x1000, scoped, tag = 'output window, operand 0, single buffered']
    %6 = vsyncpa [#allocation3], 0
    %7 = vsyncpa [#allocation4], 0
    // Predicated region
    $region2: #{tpu_custom_call.1} parent=1 // pred_check
      _
    $region3: #{tpu_custom_call.1} parent=1 // pred_check_branch
      %9 = sbr.rel (0) target = $region5
    $region4: #{tpu_custom_call.1} parent=1 // pred_region
      %s11 = ssub.s32 128, 128
      %12 = vsyncadd [#allocation3], %s11
      %s14 = sshll.u32 [#allocation2], 4
      %s15 = int_to_ptr.vmem [resolvable:$true] %s14
      %17 = dma.hbm_to_vmem [thread:$0]  %s0, 128, %s15, [#allocation3]
    $region5: #{tpu_custom_call.1} parent=1 // pred_fallthru
      _
    // Predicated region
    $region6: #{tpu_custom_call.1} parent=1 // pred_check
      _
    $region7: #{tpu_custom_call.1} parent=1 // pred_check_branch
      %19 = sbr.rel (0) target = $region9
    $region8: #{tpu_custom_call.1} parent=1 // pred_region
      %20 = dma.done [#allocation3], 128
    $region9: #{tpu_custom_call.1} parent=1 // pred_fallthru
      _
    %v21 = vld [vmem:[#allocation2] sm:$0xff]
    %23 = vrot.lane.b32.xlu0 %v21, 85
    %v24 = vpop.permute.xlu0 %23
    %26 = vrot.lane.b32.xlu0 %v21, 76
    %v27 = vpop.permute.xlu0 %26
    %29 = vrot.lane.b32.xlu0 %v21, 60
    %v30 = vpop.permute.xlu0 %29
    %32 = vrot.lane.b32.xlu0 %v21, 51
    %v33 = vpop.permute.xlu0 %32
    %vm35 = vcmask 48128
    %v36 = vsel %vm35, %v21, %v24
    %vm37 = vcmask 72704
    %v38 = vsel %vm37, %v36, %v27
    %vm39 = vcmask 97280
    %v40 = vsel %vm39, %v38, %v30
    %vm41 = vcmask 121856
    %v42 = vsel %vm41, %v40, %v33
    %vm43 = vcmask 146432
    %44 = vst.msk [vmem:[#allocation5] sm:$0xff] %vm43, %v42
    // Predicated region
    $region10: #{tpu_custom_call.1} parent=1 // pred_check
      _
    $region11: #{tpu_custom_call.1} parent=1 // pred_check_branch
      %46 = sbr.rel (0) target = $region13
    $region12: #{tpu_custom_call.1} parent=1 // pred_region
      %s48 = ssub.s32 128, 128
      %49 = vsyncadd [#allocation4], %s48
      %s51 = sshll.u32 [#allocation5], 4
      %s52 = int_to_ptr.vmem [resolvable:$true] %s51
      %54 = dma.vmem_to_hbm [thread:$0]  %s52, 128, %s1, [#allocation4]
    $region13: #{tpu_custom_call.1} parent=1 // pred_fallthru
      _
    // Predicated region
    $region14: #{tpu_custom_call.1} parent=1 // pred_check
      _
    $region15: #{tpu_custom_call.1} parent=1 // pred_check_branch
      %56 = sbr.rel (0) target = $region17
    $region16: #{tpu_custom_call.1} parent=1 // pred_region
      %57 = dma.done [#allocation4], 128
    $region17: #{tpu_custom_call.1} parent=1 // pred_fallthru
      _
    %58 = vsyncpa [#allocation3], 1
    %59 = vsyncpa [#allocation4], 1

</llo_original>
